<compile_context>
chip_gen: v7x
topology: tpu7x:2x2x1
jax: 0.10.0
libtpu: 0.0.40
codegen_flags: <defaults>
</compile_context>

<pallas_src>
import functools

import jax
import jax.numpy as jnp
from jax.experimental import pallas as pl
from jax.experimental.pallas import tpu as pltpu

HIDDEN = 100          # logical hidden width (matches the PyTorch module)
HIDDEN_PAD = 128      # lane-aligned padded hidden width used by the kernel


def _round_up(n, m):
    return ((n + m - 1) // m) * m


def _cdiv(a, b):
    return -(-a // b)


def _choose_tiling(B, cap):
    """Pick (TB, G, B_pad): TB multiple of 8, G grid steps, B_pad = TB*G.

    Padding is at most ~8 rows per grid step (never up to TB-1). G is forced
    to >= 2 when the batch is splittable so the "parallel" axis can shard
    across both v7x TensorCores.
    """
    B8 = _round_up(B, 8)
    G = max(1, _cdiv(B8, cap))
    if G == 1 and B8 >= 16:
        G = 2                      # let megacore split the batch on v7x
    TB = _round_up(_cdiv(B8, G), 8)
    return TB, G, TB * G


def mlp_kernel(x_ref, w1_ref, b1_ref, w2_ref, b2_ref, w3_ref, b3_ref, o_ref):
    # In-kernel bf16 cast of x (VPU work, hidden under MXU pushes).
    x = x_ref[...].astype(jnp.bfloat16)
    # fc1 + ReLU  (bf16 MXU inputs, f32 accumulation)
    h1 = jnp.dot(x, w1_ref[...], preferred_element_type=jnp.float32)
    h1 = jnp.maximum(h1 + b1_ref[...], 0.0)
    # fc2 + ReLU
    h2 = jnp.dot(h1.astype(jnp.bfloat16), w2_ref[...],
                 preferred_element_type=jnp.float32)
    h2 = jnp.maximum(h2 + b2_ref[...], 0.0)
    # fc3 (no activation)
    out = jnp.dot(h2.astype(jnp.bfloat16), w3_ref[...],
                  preferred_element_type=jnp.float32)
    o_ref[...] = (out + b3_ref[...]).astype(o_ref.dtype)


@functools.partial(jax.jit, static_argnames=("tb",))
def feedforward_forecaster(x, params, *, tb=4096):
    """x: (B, window_size*3) float32. Returns (B, horizon_length) float32."""
    w1, b1 = params["w1"], params["b1"]
    w2, b2 = params["w2"], params["b2"]
    w3, b3 = params["w3"], params["b3"]

    B, D_in = x.shape
    H_out = w3.shape[1]

    TB, G, B_pad = _choose_tiling(B, tb)
    if B_pad != B:
        x = jnp.pad(x, ((0, B_pad - B), (0, 0)))   # at most ~8 rows per step

    # Weights to bf16 (tiny, one-time); x stays f32 and is cast in-kernel.
    w1_bf = w1.astype(jnp.bfloat16)
    w2_bf = w2.astype(jnp.bfloat16)
    w3_bf = w3.astype(jnp.bfloat16)

    def const_spec(shape):
        # Same block index every grid step -> stays resident in VMEM.
        return pl.BlockSpec(shape, lambda i: tuple(0 for _ in shape))

    weight_bytes = sum(int(a.size) * a.dtype.itemsize
                       for a in (w1_bf, b1, w2_bf, b2, w3_bf, b3))
    cost = pl.CostEstimate(
        flops=2 * B_pad * (D_in * HIDDEN_PAD + HIDDEN_PAD * HIDDEN_PAD
                           + HIDDEN_PAD * H_out),
        transcendentals=0,
        bytes_accessed=B_pad * (D_in + H_out) * 4 + weight_bytes,
    )

    out = pl.pallas_call(
        mlp_kernel,
        out_shape=jax.ShapeDtypeStruct((B_pad, H_out), jnp.float32),
        grid_spec=pltpu.PrefetchScalarGridSpec(
            num_scalar_prefetch=0,
            grid=(G,),
            in_specs=[
                pl.BlockSpec((TB, D_in), lambda i: (i, 0)),
                const_spec(w1_bf.shape), const_spec(b1.shape),
                const_spec(w2_bf.shape), const_spec(b2.shape),
                const_spec(w3_bf.shape), const_spec(b3.shape),
            ],
            out_specs=pl.BlockSpec((TB, H_out), lambda i: (i, 0)),
        ),
        compiler_params=pltpu.CompilerParams(
            dimension_semantics=("parallel",),  # megacore sharding on v7x
        ),
        cost_estimate=cost,
    )(x, w1_bf, b1, w2_bf, b2, w3_bf, b3)

    return out[:B]


def init_params(key, window_size, horizon_length):
    """PyTorch nn.Linear-style init, hidden dim zero-padded 100 -> 128.

    Weights are stored transposed relative to nn.Linear, i.e. (in, out), so the
    kernel computes y = x @ W + b. Padded rows/cols are zero, so the forward
    pass is mathematically identical to the hidden=100 module. Any checkpoint
    loader must replicate this zero-padding.
    """
    d_in = window_size * 3
    keys = jax.random.split(key, 6)

    def linear_init(kw, kb, fan_in, fan_out):
        bound = 1.0 / jnp.sqrt(jnp.float32(fan_in))
        w = jax.random.uniform(kw, (fan_in, fan_out), jnp.float32, -bound, bound)
        b = jax.random.uniform(kb, (1, fan_out), jnp.float32, -bound, bound)
        return w, b

    w1, b1 = linear_init(keys[0], keys[1], d_in, HIDDEN)
    w2, b2 = linear_init(keys[2], keys[3], HIDDEN, HIDDEN)
    w3, b3 = linear_init(keys[4], keys[5], HIDDEN, horizon_length)

    pad_h = HIDDEN_PAD - HIDDEN
    w1 = jnp.pad(w1, ((0, 0), (0, pad_h)))          # (d_in, 128)
    b1 = jnp.pad(b1, ((0, 0), (0, pad_h)))          # (1, 128)
    w2 = jnp.pad(w2, ((0, pad_h), (0, pad_h)))      # (128, 128)
    b2 = jnp.pad(b2, ((0, 0), (0, pad_h)))          # (1, 128)
    w3 = jnp.pad(w3, ((0, pad_h), (0, 0)))          # (128, horizon)
    return {"w1": w1, "b1": b1, "w2": w2, "b2": b2, "w3": w3, "b3": b3}


def reference_forward_f32(x, p):
    """Pure f32 reference (original PyTorch module semantics; padding is 0)."""
    h1 = jnp.maximum(x @ p["w1"] + p["b1"], 0.0)
    h2 = jnp.maximum(h1 @ p["w2"] + p["b2"], 0.0)
    return h2 @ p["w3"] + p["b3"]


def reference_forward_mixed(x, p):
    """Reference mirroring the kernel's bf16-input / f32-accumulate path."""
    bf, f32 = jnp.bfloat16, jnp.float32
    h1 = jnp.dot(x.astype(bf), p["w1"].astype(bf), preferred_element_type=f32)
    h1 = jnp.maximum(h1 + p["b1"], 0.0)
    h2 = jnp.dot(h1.astype(bf), p["w2"].astype(bf), preferred_element_type=f32)
    h2 = jnp.maximum(h2 + p["b2"], 0.0)
    out = jnp.dot(h2.astype(bf), p["w3"].astype(bf), preferred_element_type=f32)
    return out + p["b3"]


if __name__ == "__main__":
    # model_params = {'window_size': 8, 'horizon_length': 4}
    window_size = 8
    horizon_length = 4
    batch = 2

    key = jax.random.PRNGKey(0)
    k_params, k_x = jax.random.split(key)
    params = init_params(k_params, window_size, horizon_length)

    x = jax.random.normal(k_x, (batch, window_size * 3), dtype=jnp.float32)

    out = feedforward_forecaster(x, params)
    out = jax.block_until_ready(out)
    assert out.shape == (batch, horizon_length)

    # Tight check against a reference that matches the kernel's precision path.
    ref_mixed = reference_forward_mixed(x, params)
    assert jnp.allclose(out, ref_mixed, atol=1e-3, rtol=1e-3), \
        "mismatch vs mixed-precision reference"

    # Loose check against pure-f32 original-module semantics.
    # TODO(synk): bf16 MXU inputs (f32 accumulate) are not bit-identical to the
    # PyTorch f32 module; loosen/tighten per use-case.
    ref_f32 = reference_forward_f32(x, params)
    assert jnp.allclose(out, ref_f32, atol=5e-2, rtol=5e-2), \
        "mismatch vs f32 reference"

    print("KERNEL_OK")
</pallas_src>

<mosaic_0001>
module attributes {stable_mosaic.version = 11 : i64} {
  func.func @mlp_kernel(%arg0: i32, %arg1: memref<8x24xf32, #tpu.memory_space<vmem>>, %arg2: memref<24x128xbf16, #tpu.memory_space<vmem>>, %arg3: memref<1x128xf32, #tpu.memory_space<vmem>>, %arg4: memref<128x128xbf16, #tpu.memory_space<vmem>>, %arg5: memref<1x128xf32, #tpu.memory_space<vmem>>, %arg6: memref<128x4xbf16, #tpu.memory_space<vmem>>, %arg7: memref<1x4xf32, #tpu.memory_space<vmem>>, %arg8: memref<8x4xf32, #tpu.memory_space<vmem>>) attributes {dimension_semantics = [#tpu.dimension_semantics<parallel>], iteration_bounds = array<i64: 1>, scalar_prefetch = 0 : i64, scratch_operands = 0 : i64, tpu.core_type = #tpu.core_type<tc>, window_params = [{transform_indices = @transform_0, window_bounds = array<i64: 8, 24>}, {pipeline_mode = #tpu.pipeline_mode<synchronous>, transform_indices = @transform_1, window_bounds = array<i64: 24, 128>}, {pipeline_mode = #tpu.pipeline_mode<synchronous>, transform_indices = @transform_2, window_bounds = array<i64: 1, 128>}, {pipeline_mode = #tpu.pipeline_mode<synchronous>, transform_indices = @transform_3, window_bounds = array<i64: 128, 128>}, {pipeline_mode = #tpu.pipeline_mode<synchronous>, transform_indices = @transform_4, window_bounds = array<i64: 1, 128>}, {pipeline_mode = #tpu.pipeline_mode<synchronous>, transform_indices = @transform_5, window_bounds = array<i64: 128, 4>}, {pipeline_mode = #tpu.pipeline_mode<synchronous>, transform_indices = @transform_6, window_bounds = array<i64: 1, 4>}, {transform_indices = @transform_7, window_bounds = array<i64: 8, 4>}]} {
    %c0 = arith.constant 0 : index
    %c0_0 = arith.constant 0 : index
    %0 = vector.load %arg1[%c0, %c0_0] : memref<8x24xf32, #tpu.memory_space<vmem>>, vector<8x24xf32>
    %1 = arith.truncf %0 : vector<8x24xf32> to vector<8x24xbf16>
    %c0_1 = arith.constant 0 : index
    %c0_2 = arith.constant 0 : index
    %2 = vector.load %arg2[%c0_1, %c0_2] : memref<24x128xbf16, #tpu.memory_space<vmem>>, vector<24x128xbf16>
    %cst = arith.constant dense<0.000000e+00> : vector<8x128xf32>
    %3 = tpu.matmul %1, %2, %cst {dimension_numbers = #tpu.dot_dimension_numbers<[1], [0], [0], [1], [0, 0, 1, 1], [], []>} : vector<8x24xbf16>, vector<24x128xbf16>, vector<8x128xf32> -> vector<8x128xf32>
    %c0_3 = arith.constant 0 : index
    %c0_4 = arith.constant 0 : index
    %4 = vector.load %arg3[%c0_3, %c0_4] : memref<1x128xf32, #tpu.memory_space<vmem>>, vector<1x128xf32>
    %5 = vector.broadcast %4 : vector<1x128xf32> to vector<8x128xf32>
    %6 = arith.addf %3, %5 : vector<8x128xf32>
    %cst_5 = arith.constant 0.000000e+00 : f32
    %7 = vector.broadcast %cst_5 : f32 to vector<8x128xf32>
    %8 = arith.maximumf %6, %7 : vector<8x128xf32>
    %9 = arith.truncf %8 : vector<8x128xf32> to vector<8x128xbf16>
    %c0_6 = arith.constant 0 : index
    %c0_7 = arith.constant 0 : index
    %10 = vector.load %arg4[%c0_6, %c0_7] : memref<128x128xbf16, #tpu.memory_space<vmem>>, vector<128x128xbf16>
    %cst_8 = arith.constant dense<0.000000e+00> : vector<8x128xf32>
    %11 = tpu.matmul %9, %10, %cst_8 {dimension_numbers = #tpu.dot_dimension_numbers<[1], [0], [0], [1], [0, 0, 1, 1], [], []>} : vector<8x128xbf16>, vector<128x128xbf16>, vector<8x128xf32> -> vector<8x128xf32>
    %c0_9 = arith.constant 0 : index
    %c0_10 = arith.constant 0 : index
    %12 = vector.load %arg5[%c0_9, %c0_10] : memref<1x128xf32, #tpu.memory_space<vmem>>, vector<1x128xf32>
    %13 = vector.broadcast %12 : vector<1x128xf32> to vector<8x128xf32>
    %14 = arith.addf %11, %13 : vector<8x128xf32>
    %cst_11 = arith.constant 0.000000e+00 : f32
    %15 = vector.broadcast %cst_11 : f32 to vector<8x128xf32>
    %16 = arith.maximumf %14, %15 : vector<8x128xf32>
    %17 = arith.truncf %16 : vector<8x128xf32> to vector<8x128xbf16>
    %c0_12 = arith.constant 0 : index
    %c0_13 = arith.constant 0 : index
    %18 = vector.load %arg6[%c0_12, %c0_13] : memref<128x4xbf16, #tpu.memory_space<vmem>>, vector<128x4xbf16>
    %cst_14 = arith.constant dense<0.000000e+00> : vector<8x4xf32>
    %19 = tpu.matmul %17, %18, %cst_14 {dimension_numbers = #tpu.dot_dimension_numbers<[1], [0], [0], [1], [0, 0, 1, 1], [], []>} : vector<8x128xbf16>, vector<128x4xbf16>, vector<8x4xf32> -> vector<8x4xf32>
    %c0_15 = arith.constant 0 : index
    %c0_16 = arith.constant 0 : index
    %20 = vector.load %arg7[%c0_15, %c0_16] : memref<1x4xf32, #tpu.memory_space<vmem>>, vector<1x4xf32>
    %21 = vector.broadcast %20 : vector<1x4xf32> to vector<8x4xf32>
    %22 = arith.addf %19, %21 : vector<8x4xf32>
    %c0_17 = arith.constant 0 : index
    %c0_18 = arith.constant 0 : index
    %23 = vector.load %arg8[%c0_17, %c0_18] : memref<8x4xf32, #tpu.memory_space<vmem>>, vector<8x4xf32>
    tpu.vector_store %arg8[%c0_17, %c0_18], %22 {strides = array<i32>} : memref<8x4xf32, #tpu.memory_space<vmem>>, vector<8x4xf32>,
    return
  }
  func.func @transform_0(%arg0: i32) -> (i32, i32) {
    %c0_i32 = arith.constant 0 : i32
    %c0_i32_0 = arith.constant 0 : i32
    return %arg0, %c0_i32 : i32, i32
  }
  func.func @transform_1(%arg0: i32) -> (i32, i32) {
    %c0_i32 = arith.constant 0 : i32
    %c0_i32_0 = arith.constant 0 : i32
    %c0_i32_1 = arith.constant 0 : i32
    return %c0_i32, %c0_i32_0 : i32, i32
  }
  func.func @transform_2(%arg0: i32) -> (i32, i32) {
    %c0_i32 = arith.constant 0 : i32
    %c0_i32_0 = arith.constant 0 : i32
    %c0_i32_1 = arith.constant 0 : i32
    return %c0_i32, %c0_i32_0 : i32, i32
  }
  func.func @transform_3(%arg0: i32) -> (i32, i32) {
    %c0_i32 = arith.constant 0 : i32
    %c0_i32_0 = arith.constant 0 : i32
    %c0_i32_1 = arith.constant 0 : i32
    return %c0_i32, %c0_i32_0 : i32, i32
  }
  func.func @transform_4(%arg0: i32) -> (i32, i32) {
    %c0_i32 = arith.constant 0 : i32
    %c0_i32_0 = arith.constant 0 : i32
    %c0_i32_1 = arith.constant 0 : i32
    return %c0_i32, %c0_i32_0 : i32, i32
  }
  func.func @transform_5(%arg0: i32) -> (i32, i32) {
    %c0_i32 = arith.constant 0 : i32
    %c0_i32_0 = arith.constant 0 : i32
    %c0_i32_1 = arith.constant 0 : i32
    return %c0_i32, %c0_i32_0 : i32, i32
  }
  func.func @transform_6(%arg0: i32) -> (i32, i32) {
    %c0_i32 = arith.constant 0 : i32
    %c0_i32_0 = arith.constant 0 : i32
    %c0_i32_1 = arith.constant 0 : i32
    return %c0_i32, %c0_i32_0 : i32, i32
  }
  func.func @transform_7(%arg0: i32) -> (i32, i32) {
    %c0_i32 = arith.constant 0 : i32
    %c0_i32_0 = arith.constant 0 : i32
    return %arg0, %c0_i32 : i32, i32
  }
}

</mosaic_0001>

<llo_original>
// kernel: feedforward_forecaster.1
$region0: #{feedforward_forecaster.1}
  #allocation0 [shape = 'u32[]', space=smem, size = 0x4, offset = 0x4, fixed_abs, tag = 'smem constant byte address 0x4 - core index']
  #allocation1 [shape = 'u32[144,128]{1,0:T(1,128)}', space=vmem, size = 0x12000, scoped, tag = 'internal scratch']
  %s0 = inlined_call_operand.vmem [shape: f32[8,24], index: 0, kind: input, shape index: {}]
  %s1 = inlined_call_operand.vmem [shape: bf16[24,128], index: 1, kind: input, shape index: {}]
  %s2 = inlined_call_operand.vmem [shape: f32[1,128], index: 2, kind: input, shape index: {}]
  %s3 = inlined_call_operand.vmem [shape: bf16[128,128], index: 3, kind: input, shape index: {}]
  %s4 = inlined_call_operand.vmem [shape: f32[1,128], index: 4, kind: input, shape index: {}]
  %s5 = inlined_call_operand.vmem [shape: bf16[128,4], index: 5, kind: input, shape index: {}]
  %s6 = inlined_call_operand.vmem [shape: f32[1,4], index: 6, kind: input, shape index: {}]
  %s7 = inlined_call_operand.vmem [shape: f32[8,4], index: 7, kind: output, shape index: {}]
  %s8 = sld [smem:[#allocation0]]
  $region38: #{feedforward_forecaster.1} parent=0
    _
  %s10 = ssub.s32 1, %s8
  %s11 = scalar_select 0, %s10, %s8
  // Predicated region
  $region2: #{feedforward_forecaster.1} parent=0 // pred_check
    _
  $region3: #{feedforward_forecaster.1} parent=0 // pred_check_branch
    %13 = sbr.rel (0) target = $region5
  $region4: #{feedforward_forecaster.1} parent=0 // pred_region
    _
  $region5: #{feedforward_forecaster.1} parent=0 // pred_fallthru
    _
  // Predicated region
  $region6: #{feedforward_forecaster.1} parent=0 // pred_check
    _
  $region7: #{feedforward_forecaster.1} parent=0 // pred_check_branch
    %15 = sbr.rel (0) target = $region9
  $region8: #{feedforward_forecaster.1} parent=0 // pred_region
    _
  $region9: #{feedforward_forecaster.1} parent=0 // pred_fallthru
    _
  // Predicated region
  $region10: #{feedforward_forecaster.1} parent=0 // pred_check
    _
  $region11: #{feedforward_forecaster.1} parent=0 // pred_check_branch
    %17 = sbr.rel (0) target = $region13
  $region12: #{feedforward_forecaster.1} parent=0 // pred_region
    _
  $region13: #{feedforward_forecaster.1} parent=0 // pred_fallthru
    _
  // Predicated region
  $region14: #{feedforward_forecaster.1} parent=0 // pred_check
    _
  $region15: #{feedforward_forecaster.1} parent=0 // pred_check_branch
    %19 = sbr.rel (0) target = $region17
  $region16: #{feedforward_forecaster.1} parent=0 // pred_region
    _
  $region17: #{feedforward_forecaster.1} parent=0 // pred_fallthru
    _
  // Predicated region
  $region18: #{feedforward_forecaster.1} parent=0 // pred_check
    _
  $region19: #{feedforward_forecaster.1} parent=0 // pred_check_branch
    %21 = sbr.rel (0) target = $region21
  $region20: #{feedforward_forecaster.1} parent=0 // pred_region
    _
  $region21: #{feedforward_forecaster.1} parent=0 // pred_fallthru
    _
  // Predicated region
  $region22: #{feedforward_forecaster.1} parent=0 // pred_check
    _
  $region23: #{feedforward_forecaster.1} parent=0 // pred_check_branch
    %23 = sbr.rel (0) target = $region25
  $region24: #{feedforward_forecaster.1} parent=0 // pred_region
    _
  $region25: #{feedforward_forecaster.1} parent=0 // pred_fallthru
    _
  // Predicated region
  $region26: #{feedforward_forecaster.1} parent=0 // pred_check
    _
  $region27: #{feedforward_forecaster.1} parent=0 // pred_check_branch
    %25 = sbr.rel (0) target = $region29
  $region28: #{feedforward_forecaster.1} parent=0 // pred_region
    _
  $region29: #{feedforward_forecaster.1} parent=0 // pred_fallthru
    _
  %v27 = vld [vmem:[%s0] sm:$0xff]
  %v28 = vpack.c.bf16 %v27, %v27
  %v29 = vld [vmem:[%s1] sm:$0xf]
  %v30 = vld [vmem:[%s1 + $0x4] sm:$0xf]
  %v31 = vld [vmem:[%s1 + $0x8] sm:$0xf]
  %v32 = vld [vmem:[%s2] sm:$0x1]
  %v34 = vlaneseq
  %v35 = vshrl.u32 %v34, 7
  %v36 = vsub.s32 0, %v35
  %v37 = vrot.slane %v32, %v36
  %v42 = vunpack.c.l.b16 %v29
  %v43 = vunpack.c.l.b16 %v30
  %v44 = vunpack.c.l.b16 %v31
  %v45 = vpack.c.b16 %v43, %v42
  %v46 = vpack.c.b16 %v44, %v44
  %vm48 = vcmask 195584
  %v50 = vsel %vm48, %v28, 0
  %vm52 = vcmask 1043456
  %v54 = vsel %vm52, %v46, 0
  %56 = vmatprep.subr.bf16.mxu0 0
  %57 = vmatpush1.bf16.msra.mxu0 %v45
  %58 = vmatprep.subr.bf16.mxu0 0
  %59 = vmatpush1.bf16.msra.mxu0 %v54
  %60 = vmatprep.subr.bf16.mxu0 0
  %61 = vmatpush1.bf16.msra.mxu0 0
  %62 = vmatprep.subr.bf16.mxu0 0
  %63 = vmatpush1.bf16.msra.mxu0 0
  %64 = vmatprep.subr.bf16.mxu0 0
  %65 = vmatpush1.bf16.msra.mxu0 0
  %66 = vmatprep.subr.bf16.mxu0 0
  %67 = vmatpush1.bf16.msra.mxu0 0
  %68 = vmatprep.subr.bf16.mxu0 0
  %69 = vmatpush1.bf16.msra.mxu0 0
  %70 = vmatprep.subr.bf16.mxu0 0
  %71 = vmatpush1.bf16.msra.mxu0 0
  %72 = vmatprep.subr.bf16.mxu0 0
  %73 = vmatpush1.bf16.msra.mxu0 0
  %74 = vmatprep.subr.bf16.mxu0 0
  %75 = vmatpush1.bf16.msra.mxu0 0
  %76 = vmatprep.subr.bf16.mxu0 0
  %77 = vmatpush1.bf16.msra.mxu0 0
  %78 = vmatprep.subr.bf16.mxu0 0
  %79 = vmatpush1.bf16.msra.mxu0 0
  %80 = vmatprep.subr.bf16.mxu0 0
  %81 = vmatpush1.bf16.msra.mxu0 0
  %82 = vmatprep.subr.bf16.mxu0 0
  %83 = vmatpush1.bf16.msra.mxu0 0
  %84 = vmatprep.subr.bf16.mxu0 0
  %85 = vmatpush1.bf16.msra.mxu0 0
  %86 = vmatprep.subr.bf16.mxu0 0
  %87 = vmatpush1.bf16.msra.mxu0 0
  %88 = vmatprep.mubr.bf16.mxu0 0
  %89 = vmatmul.mubr.bf16.gmra.mrb[0].mxu0 %v50
  %v90 = vpop.f32.mrb[0].mxu0
  %v91 = vadd.f32 %v37, %v90
  %v92 = vpop.f32.mrb[0].mxu0
  %v93 = vpop.f32.mrb[0].mxu0
  %v94 = vpop.f32.mrb[0].mxu0
  %95 = vdwg.mxu0
  %v96 = vmax.f32 %v91, 0.0
  %v97 = vpack.c.bf16 %v96, %v96
  %v98 = vld [vmem:[%s3] sm:$0xf]
  %v99 = vld [vmem:[%s3 + $0x4] sm:$0xf]
  %v100 = vld [vmem:[%s3 + $0x8] sm:$0xf]
  %v101 = vld [vmem:[%s3 + $0xc] sm:$0xf]
  %v102 = vld [vmem:[%s3 + $0x10] sm:$0xf]
  %v103 = vld [vmem:[%s3 + $0x14] sm:$0xf]
  %v104 = vld [vmem:[%s3 + $0x18] sm:$0xf]
  %v105 = vld [vmem:[%s3 + $0x1c] sm:$0xf]
  %v106 = vld [vmem:[%s3 + $0x20] sm:$0xf]
  %v107 = vld [vmem:[%s3 + $0x24] sm:$0xf]
  %v108 = vld [vmem:[%s3 + $0x28] sm:$0xf]
  %v109 = vld [vmem:[%s3 + $0x2c] sm:$0xf]
  %v110 = vld [vmem:[%s3 + $0x30] sm:$0xf]
  %v111 = vld [vmem:[%s3 + $0x34] sm:$0xf]
  %v112 = vld [vmem:[%s3 + $0x38] sm:$0xf]
  %v113 = vld [vmem:[%s3 + $0x3c] sm:$0xf]
  %v114 = vld [vmem:[%s4] sm:$0x1]
  %v116 = vlaneseq
  %v117 = vshrl.u32 %v116, 7
  %v118 = vsub.s32 0, %v117
  %v119 = vrot.slane %v114, %v118
  %v137 = vunpack.c.l.b16 %v98
  %v138 = vunpack.c.l.b16 %v99
  %v139 = vunpack.c.l.b16 %v100
  %v140 = vunpack.c.l.b16 %v101
  %v141 = vunpack.c.l.b16 %v102
  %v142 = vunpack.c.l.b16 %v103
  %v143 = vunpack.c.l.b16 %v104
  %v144 = vunpack.c.l.b16 %v105
  %v145 = vunpack.c.l.b16 %v106
  %v146 = vunpack.c.l.b16 %v107
  %v147 = vunpack.c.l.b16 %v108
  %v148 = vunpack.c.l.b16 %v109
  %v149 = vunpack.c.l.b16 %v110
  %v150 = vunpack.c.l.b16 %v111
  %v151 = vunpack.c.l.b16 %v112
  %v152 = vunpack.c.l.b16 %v113
  %v153 = vpack.c.b16 %v138, %v137
  %v154 = vpack.c.b16 %v140, %v139
  %v155 = vpack.c.b16 %v142, %v141
  %v156 = vpack.c.b16 %v144, %v143
  %v157 = vpack.c.b16 %v146, %v145
  %v158 = vpack.c.b16 %v148, %v147
  %v159 = vpack.c.b16 %v150, %v149
  %v160 = vpack.c.b16 %v152, %v151
  %169 = vmatprep.subr.bf16.mxu0 0
  %170 = vmatpush1.bf16.msra.mxu0 %v153
  %171 = vmatprep.subr.bf16.mxu0 0
  %172 = vmatpush1.bf16.msra.mxu0 %v154
  %173 = vmatprep.subr.bf16.mxu0 0
  %174 = vmatpush1.bf16.msra.mxu0 %v155
  %175 = vmatprep.subr.bf16.mxu0 0
  %176 = vmatpush1.bf16.msra.mxu0 %v156
  %177 = vmatprep.subr.bf16.mxu0 0
  %178 = vmatpush1.bf16.msra.mxu0 %v157
  %179 = vmatprep.subr.bf16.mxu0 0
  %180 = vmatpush1.bf16.msra.mxu0 %v158
  %181 = vmatprep.subr.bf16.mxu0 0
  %182 = vmatpush1.bf16.msra.mxu0 %v159
  %183 = vmatprep.subr.bf16.mxu0 0
  %184 = vmatpush1.bf16.msra.mxu0 %v160
  %185 = vmatprep.subr.bf16.mxu0 0
  %186 = vmatpush1.bf16.msra.mxu0 0
  %187 = vmatprep.subr.bf16.mxu0 0
  %188 = vmatpush1.bf16.msra.mxu0 0
  %189 = vmatprep.subr.bf16.mxu0 0
  %190 = vmatpush1.bf16.msra.mxu0 0
  %191 = vmatprep.subr.bf16.mxu0 0
  %192 = vmatpush1.bf16.msra.mxu0 0
  %193 = vmatprep.subr.bf16.mxu0 0
  %194 = vmatpush1.bf16.msra.mxu0 0
  %195 = vmatprep.subr.bf16.mxu0 0
  %196 = vmatpush1.bf16.msra.mxu0 0
  %197 = vmatprep.subr.bf16.mxu0 0
  %198 = vmatpush1.bf16.msra.mxu0 0
  %199 = vmatprep.subr.bf16.mxu0 0
  %200 = vmatpush1.bf16.msra.mxu0 0
  %201 = vmatprep.mubr.bf16.mxu0 0
  %202 = vmatmul.mubr.bf16.gmra.mrb[0].mxu0 %v97
  %v203 = vpop.f32.mrb[0].mxu0
  %v204 = vadd.f32 %v119, %v203
  %v205 = vpop.f32.mrb[0].mxu0
  %v206 = vpop.f32.mrb[0].mxu0
  %v207 = vpop.f32.mrb[0].mxu0
  %208 = vdwg.mxu0
  %v209 = vmax.f32 %v204, 0.0
  %v210 = vpack.c.bf16 %v209, %v209
  %v211 = vld [vmem:[%s5] sm:$0xf]
  %v212 = vld [vmem:[%s5 + $0x4] sm:$0xf]
  %v213 = vld [vmem:[%s5 + $0x8] sm:$0xf]
  %v214 = vld [vmem:[%s5 + $0xc] sm:$0xf]
  %v215 = vld [vmem:[%s5 + $0x10] sm:$0xf]
  %v216 = vld [vmem:[%s5 + $0x14] sm:$0xf]
  %v217 = vld [vmem:[%s5 + $0x18] sm:$0xf]
  %v218 = vld [vmem:[%s5 + $0x1c] sm:$0xf]
  %v219 = vld [vmem:[%s5 + $0x20] sm:$0xf]
  %v220 = vld [vmem:[%s5 + $0x24] sm:$0xf]
  %v221 = vld [vmem:[%s5 + $0x28] sm:$0xf]
  %v222 = vld [vmem:[%s5 + $0x2c] sm:$0xf]
  %v223 = vld [vmem:[%s5 + $0x30] sm:$0xf]
  %v224 = vld [vmem:[%s5 + $0x34] sm:$0xf]
  %v225 = vld [vmem:[%s5 + $0x38] sm:$0xf]
  %v226 = vld [vmem:[%s5 + $0x3c] sm:$0xf]
  %v227 = vld [vmem:[%s6] sm:$0x1]
  %v229 = vlaneseq
  %v230 = vshrl.u32 %v229, 7
  %v231 = vsub.s32 0, %v230
  %v232 = vrot.slane %v227, %v231
  %v250 = vunpack.c.l.b16 %v211
  %v251 = vunpack.c.l.b16 %v212
  %v252 = vunpack.c.l.b16 %v213
  %v253 = vunpack.c.l.b16 %v214
  %v254 = vunpack.c.l.b16 %v215
  %v255 = vunpack.c.l.b16 %v216
  %v256 = vunpack.c.l.b16 %v217
  %v257 = vunpack.c.l.b16 %v218
  %v258 = vunpack.c.l.b16 %v219
  %v259 = vunpack.c.l.b16 %v220
  %v260 = vunpack.c.l.b16 %v221
  %v261 = vunpack.c.l.b16 %v222
  %v262 = vunpack.c.l.b16 %v223
  %v263 = vunpack.c.l.b16 %v224
  %v264 = vunpack.c.l.b16 %v225
  %v265 = vunpack.c.l.b16 %v226
  %v266 = vpack.c.b16 %v251, %v250
  %v267 = vpack.c.b16 %v253, %v252
  %v268 = vpack.c.b16 %v255, %v254
  %v269 = vpack.c.b16 %v257, %v256
  %v270 = vpack.c.b16 %v259, %v258
  %v271 = vpack.c.b16 %v261, %v260
  %v272 = vpack.c.b16 %v263, %v262
  %v273 = vpack.c.b16 %v265, %v264
  %282 = vmatprep.subr.bf16.mxu0 0
  %283 = vmatpush1.bf16.msra.mxu0 %v266
  %284 = vmatprep.subr.bf16.mxu0 0
  %285 = vmatpush1.bf16.msra.mxu0 %v267
  %286 = vmatprep.subr.bf16.mxu0 0
  %287 = vmatpush1.bf16.msra.mxu0 %v268
  %288 = vmatprep.subr.bf16.mxu0 0
  %289 = vmatpush1.bf16.msra.mxu0 %v269
  %290 = vmatprep.subr.bf16.mxu0 0
  %291 = vmatpush1.bf16.msra.mxu0 %v270
  %292 = vmatprep.subr.bf16.mxu0 0
  %293 = vmatpush1.bf16.msra.mxu0 %v271
  %294 = vmatprep.subr.bf16.mxu0 0
  %295 = vmatpush1.bf16.msra.mxu0 %v272
  %296 = vmatprep.subr.bf16.mxu0 0
  %297 = vmatpush1.bf16.msra.mxu0 %v273
  %298 = vmatprep.subr.bf16.mxu0 0
  %299 = vmatpush1.bf16.msra.mxu0 0
  %300 = vmatprep.subr.bf16.mxu0 0
  %301 = vmatpush1.bf16.msra.mxu0 0
  %302 = vmatprep.subr.bf16.mxu0 0
  %303 = vmatpush1.bf16.msra.mxu0 0
  %304 = vmatprep.subr.bf16.mxu0 0
  %305 = vmatpush1.bf16.msra.mxu0 0
  %306 = vmatprep.subr.bf16.mxu0 0
  %307 = vmatpush1.bf16.msra.mxu0 0
  %308 = vmatprep.subr.bf16.mxu0 0
  %309 = vmatpush1.bf16.msra.mxu0 0
  %310 = vmatprep.subr.bf16.mxu0 0
  %311 = vmatpush1.bf16.msra.mxu0 0
  %312 = vmatprep.subr.bf16.mxu0 0
  %313 = vmatpush1.bf16.msra.mxu0 0
  %314 = vmatprep.mubr.bf16.mxu0 0
  %315 = vmatmul.mubr.bf16.gmra.mrb[0].mxu0 %v210
  %v316 = vpop.f32.mrb[0].mxu0
  %v317 = vadd.f32 %v232, %v316
  %v318 = vpop.f32.mrb[0].mxu0
  %v319 = vpop.f32.mrb[0].mxu0
  %v320 = vpop.f32.mrb[0].mxu0
  %321 = vdwg.mxu0
  %vm322 = vcmask 31744
  %323 = vst.msk [vmem:[%s7] sm:$0xff] %vm322, %v317
  // Predicated region
  $region30: #{feedforward_forecaster.1} parent=0 // pred_check
    _
  $region31: #{feedforward_forecaster.1} parent=0 // pred_check_branch
    %325 = sbr.rel (0) target = $region33
  $region32: #{feedforward_forecaster.1} parent=0 // pred_region
    _
  $region33: #{feedforward_forecaster.1} parent=0 // pred_fallthru
    _
  // Predicated region
  $region34: #{feedforward_forecaster.1} parent=0 // pred_check
    _
  $region35: #{feedforward_forecaster.1} parent=0 // pred_check_branch
    %327 = sbr.rel (0) target = $region37
  $region36: #{feedforward_forecaster.1} parent=0 // pred_region
    _
  $region37: #{feedforward_forecaster.1} parent=0 // pred_fallthru
    _

</llo_original>
